<compile_context>
chip_gen: v7x
topology: tpu7x:2x2x1
jax: 0.10.0
libtpu: 0.0.40
codegen_flags: <defaults>
</compile_context>

<pallas_src>
import functools

import jax
import jax.numpy as jnp
from jax.experimental import pallas as pl
from jax.experimental.pallas import tpu as pltpu


def _round_up(x, m):
    return (x + m - 1) // m * m


def _resnetfc_head_kernel(x_ref, pose_ref, w0f_ref, w0p_ref, b0_ref, w1_ref, b1_ref, o_ref,
                          *, inv_hw):
    # x_ref:    (TILE_B, C, H*W) backbone feature-map tile (streamed, bf16 or f32)
    # pose_ref: (TILE_B, P)      pose tile (streamed)
    # w0f_ref:  (C, D)           bottleneck_0 weight rows for pooled features (pre-transposed)
    # w0p_ref:  (P, D)           bottleneck_0 weight rows for pose features
    # b0_ref:   (1, D)
    # w1_ref:   (D, D)           bottleneck weight (pre-transposed)
    # b1_ref:   (1, D)
    # o_ref:    (TILE_B, D)

    # AvgPool2d([9, 15]) over the full spatial map + flatten: lane reduce with f32 accumulation
    # (no hand-written full-tile f32 upcast).
    pooled = jnp.sum(x_ref[...], axis=-1, dtype=jnp.float32) * inv_hw   # (TILE_B, C)

    # torch.cat([pooled, pose], 1) @ W0 == pooled @ W0f + pose @ W0p.
    h = jnp.dot(pooled, w0f_ref[...], preferred_element_type=jnp.float32) + b0_ref[...]
    pose = pose_ref[...].astype(jnp.float32)                    # (TILE_B, P), P is tiny
    w0p = w0p_ref[...]
    for p in range(pose.shape[1]):                              # static unroll; VPU broadcast-FMA
        h = h + pose[:, p:p + 1] * w0p[p:p + 1, :]              # avoids a wasteful K=2 MXU matmul

    # bottleneck: Linear(D, D); no activation in the reference forward.
    f = jnp.dot(h, w1_ref[...], preferred_element_type=jnp.float32) + b1_ref[...]
    o_ref[...] = f.astype(o_ref.dtype)


def resnetfc_forward(feat_map, pose, w0, b0, w1, b1, *, tile_b=None,
                     stream_dtype=jnp.bfloat16):
    """Fused (avgpool + flatten + concat(pose) + bottleneck_0 + bottleneck) forward.

    feat_map: (B, C, H, W) backbone output
    pose:     (B, P)
    w0:       (C + P, D)   bottleneck_0 weight, pre-transposed (in_features, out_features)
    b0:       (1, D) or (D,)
    w1:       (D, D)       bottleneck weight, pre-transposed
    b1:       (1, D) or (D,)
    returns:  (B, D) float32
    """
    B, C, H, W = feat_map.shape
    P = pose.shape[1]
    D = w0.shape[1]
    HW = H * W

    # The kernel is HBM-BW bound on the feature map; stream it in bf16 (the cast fuses with
    # the flattening reshape below; ideally the backbone already emits bf16).
    if stream_dtype is not None and feat_map.dtype != stream_dtype:
        feat_map = feat_map.astype(stream_dtype)
    x3 = feat_map.reshape(B, C, HW)
    itemsize = x3.dtype.itemsize

    # Weights/biases kept in f32 (resident, so their bytes don't matter); math accumulates in f32.
    w0 = w0.astype(jnp.float32)
    b0 = b0.reshape(1, D).astype(jnp.float32)
    w1 = w1.astype(jnp.float32)
    b1 = b1.reshape(1, D).astype(jnp.float32)
    w0f, w0p = w0[:C], w0[C:]

    # ---- VMEM-aware batch-tile sizing ---------------------------------------------------
    # Physical VMEM differs per generation (128 MiB v5e/v6e, 64 MiB per TensorCore on v7x);
    # size against it and pass an explicit vmem_limit_bytes instead of relying on the default
    # scoped limit (16 MiB v5e / 32 MiB v6e,v7x).
    try:
        vmem_phys = int(pltpu.get_tpu_info().vmem_capacity_bytes)
    except Exception:  # no device / older API: assume the smallest (v7x per-core) VMEM
        vmem_phys = 64 * 1024 * 1024
    vmem_limit = int(min(vmem_phys * 3 // 4, 96 * 1024 * 1024))

    # Per-batch-row VMEM cost of the streamed block *including* (sublane, lane) padding:
    # HW = 135 pads to 256 lanes; C pads to the sublane tile (8 for f32, 16 for bf16).
    lane_hw = _round_up(HW, 128)
    sub_tile = 8 * max(1, 4 // itemsize)
    row_stream = _round_up(C, sub_tile) * lane_hw * itemsize          # one streamed row
    row_f32 = _round_up(C, 8) * lane_hw * 4                           # worst-case upcast temp
    row_misc = (_round_up(C, 128) + 8 * _round_up(D, 128)) * 4        # pooled / h / f / out rows
    per_row = 2 * row_stream + row_f32 + row_misc                     # 2x = double buffering

    resident = 2 * ((C + P) * D + D * D + 2 * D) * 4                  # double-buffered weights

    if tile_b is None:
        budget = max(per_row, vmem_limit - resident - (4 << 20))      # leave headroom
        tile_b = max(8, min(1024, budget // per_row) // 8 * 8)
        # Keep >= 2 grid steps when the batch allows it so dimension_semantics="parallel"
        # can spread batch tiles across v7x's two TensorCores.
        tile_b = max(8, min(tile_b, _round_up(pl.cdiv(B, 2), 8)))

    if B <= tile_b:
        tile_b = B                       # single full-extent tile: no padding, no ragged tile
    else:
        tile_b = max(8, _round_up(tile_b, 8))   # 8-aligned interior tiles; last tile is ragged
    grid = (pl.cdiv(B, tile_b),)         # no host-side jnp.pad: OOB tail rows are masked

    cost = pl.CostEstimate(
        flops=(B * C * HW                                   # avg-pool adds
               + 2 * B * (C + P) * D + B * D                # bottleneck_0 (+ bias)
               + 2 * B * D * D + B * D),                    # bottleneck (+ bias)
        transcendentals=0,
        bytes_accessed=(B * C * HW * itemsize + B * P * pose.dtype.itemsize
                        + ((C + P) * D + D * D + 2 * D) * 4 + B * D * 4),
    )

    out = pl.pallas_call(
        functools.partial(_resnetfc_head_kernel, inv_hw=1.0 / float(HW)),
        out_shape=jax.ShapeDtypeStruct((B, D), jnp.float32),
        grid_spec=pltpu.PrefetchScalarGridSpec(
            num_scalar_prefetch=0,
            grid=grid,
            in_specs=[
                pl.BlockSpec((tile_b, C, HW), lambda i: (i, 0, 0)),  # streamed per batch tile
                pl.BlockSpec((tile_b, P), lambda i: (i, 0)),         # streamed per batch tile
                pl.BlockSpec((C, D), lambda i: (0, 0)),              # resident across grid
                pl.BlockSpec((P, D), lambda i: (0, 0)),              # resident
                pl.BlockSpec((1, D), lambda i: (0, 0)),              # resident
                pl.BlockSpec((D, D), lambda i: (0, 0)),              # resident
                pl.BlockSpec((1, D), lambda i: (0, 0)),              # resident
            ],
            out_specs=pl.BlockSpec((tile_b, D), lambda i: (i, 0)),   # lane-dense output slab
        ),
        compiler_params=pltpu.CompilerParams(
            dimension_semantics=("parallel",),  # independent batch tiles -> megacore sharding
            vmem_limit_bytes=vmem_limit,
        ),
        cost_estimate=cost,
    )(x3, pose, w0f, w0p, b0, w1, b1)

    return out


if __name__ == "__main__":
    # Small shapes consistent with the module: backbone output is (B, C, 9, 15) so that
    # AvgPool2d([9, 15]) yields (B, C, 1, 1); pose is (B, 2); bottleneck_dim = 256 (module default).
    B, C, H, W = 2, 64, 9, 15
    P, D = 2, 256

    key = jax.random.PRNGKey(0)
    kf, kp, k0, kb0, k1, kb1 = jax.random.split(key, 6)
    # Stream the backbone features in bf16 (the fused head is HBM-bandwidth bound).
    feat_map = jax.random.normal(kf, (B, C, H, W), dtype=jnp.float32).astype(jnp.bfloat16)
    pose = jax.random.normal(kp, (B, P), dtype=jnp.float32)
    w0 = jax.random.normal(k0, (C + P, D), dtype=jnp.float32) * 0.05
    b0 = jax.random.normal(kb0, (1, D), dtype=jnp.float32) * 0.05
    w1 = jax.random.normal(k1, (D, D), dtype=jnp.float32) * 0.05
    b1 = jax.random.normal(kb1, (1, D), dtype=jnp.float32) * 0.05

    out = resnetfc_forward(feat_map, pose, w0, b0, w1, b1)
    out = jax.block_until_ready(out)

    # Pure-JAX reference mirroring ResNetFc.forward downstream of the backbone.
    pooled = jnp.mean(feat_map.astype(jnp.float32), axis=(2, 3))    # AvgPool2d([9,15]) + view
    xcat = jnp.concatenate([pooled, pose], axis=1)                  # torch.cat([x, pose], 1)
    hp = jnp.dot(xcat, w0, precision=jax.lax.Precision.HIGHEST) + b0
    ref = jnp.dot(hp, w1, precision=jax.lax.Precision.HIGHEST) + b1

    assert out.shape == (B, D)
    assert jnp.allclose(out, ref, atol=2e-3, rtol=2e-3), float(jnp.max(jnp.abs(out - ref)))
    print("KERNEL_OK")
</pallas_src>

<mosaic_0001>
module attributes {stable_mosaic.version = 11 : i64} {
  func.func @_resnetfc_head_kernel(%arg0: i32, %arg1: memref<2x64x135xbf16, #tpu.memory_space<vmem>>, %arg2: memref<2x2xf32, #tpu.memory_space<vmem>>, %arg3: memref<64x256xf32, #tpu.memory_space<vmem>>, %arg4: memref<2x256xf32, #tpu.memory_space<vmem>>, %arg5: memref<1x256xf32, #tpu.memory_space<vmem>>, %arg6: memref<256x256xf32, #tpu.memory_space<vmem>>, %arg7: memref<1x256xf32, #tpu.memory_space<vmem>>, %arg8: memref<2x256xf32, #tpu.memory_space<vmem>>) attributes {dimension_semantics = [#tpu.dimension_semantics<parallel>], iteration_bounds = array<i64: 1>, scalar_prefetch = 0 : i64, scratch_operands = 0 : i64, tpu.core_type = #tpu.core_type<tc>, window_params = [{transform_indices = @transform_0, window_bounds = array<i64: 2, 64, 135>}, {transform_indices = @transform_1, window_bounds = array<i64: 2, 2>}, {pipeline_mode = #tpu.pipeline_mode<synchronous>, transform_indices = @transform_2, window_bounds = array<i64: 64, 256>}, {pipeline_mode = #tpu.pipeline_mode<synchronous>, transform_indices = @transform_3, window_bounds = array<i64: 2, 256>}, {pipeline_mode = #tpu.pipeline_mode<synchronous>, transform_indices = @transform_4, window_bounds = array<i64: 1, 256>}, {pipeline_mode = #tpu.pipeline_mode<synchronous>, transform_indices = @transform_5, window_bounds = array<i64: 256, 256>}, {pipeline_mode = #tpu.pipeline_mode<synchronous>, transform_indices = @transform_6, window_bounds = array<i64: 1, 256>}, {transform_indices = @transform_7, window_bounds = array<i64: 2, 256>}]} {
    %c0 = arith.constant 0 : index
    %c0_0 = arith.constant 0 : index
    %c0_1 = arith.constant 0 : index
    %0 = vector.load %arg1[%c0, %c0_0, %c0_1] : memref<2x64x135xbf16, #tpu.memory_space<vmem>>, vector<2x64x135xbf16>
    %1 = arith.extf %0 : vector<2x64x135xbf16> to vector<2x64x135xf32>
    %cst = arith.constant dense<0.000000e+00> : vector<2x64xf32>
    %2 = vector.multi_reduction <add>, %1, %cst [2] : vector<2x64x135xf32> to vector<2x64xf32>
    %cst_2 = arith.constant 0.00740740728 : f32
    %3 = vector.broadcast %cst_2 : f32 to vector<2x64xf32>
    %4 = arith.mulf %2, %3 : vector<2x64xf32>
    %c0_3 = arith.constant 0 : index
    %c0_4 = arith.constant 0 : index
    %5 = vector.load %arg3[%c0_3, %c0_4] : memref<64x256xf32, #tpu.memory_space<vmem>>, vector<64x256xf32>
    %cst_5 = arith.constant dense<0.000000e+00> : vector<2x256xf32>
    %6 = tpu.matmul %4, %5, %cst_5 {dimension_numbers = #tpu.dot_dimension_numbers<[1], [0], [0], [1], [0, 0, 1, 1], [], []>} : vector<2x64xf32>, vector<64x256xf32>, vector<2x256xf32> -> vector<2x256xf32>
    %c0_6 = arith.constant 0 : index
    %c0_7 = arith.constant 0 : index
    %7 = vector.load %arg5[%c0_6, %c0_7] : memref<1x256xf32, #tpu.memory_space<vmem>>, vector<1x256xf32>
    %8 = vector.broadcast %7 : vector<1x256xf32> to vector<2x256xf32>
    %9 = arith.addf %6, %8 : vector<2x256xf32>
    %c0_8 = arith.constant 0 : index
    %c0_9 = arith.constant 0 : index
    %10 = vector.load %arg2[%c0_8, %c0_9] : memref<2x2xf32, #tpu.memory_space<vmem>>, vector<2x2xf32>
    %c0_10 = arith.constant 0 : index
    %c0_11 = arith.constant 0 : index
    %11 = vector.load %arg4[%c0_10, %c0_11] : memref<2x256xf32, #tpu.memory_space<vmem>>, vector<2x256xf32>
    %12 = vector.extract_strided_slice %10 {offsets = [0, 0], sizes = [2, 1], strides = [1, 1]} : vector<2x2xf32> to vector<2x1xf32>
    %13 = vector.extract_strided_slice %11 {offsets = [0, 0], sizes = [1, 256], strides = [1, 1]} : vector<2x256xf32> to vector<1x256xf32>
    %14 = vector.broadcast %12 : vector<2x1xf32> to vector<2x256xf32>
    %15 = vector.broadcast %13 : vector<1x256xf32> to vector<2x256xf32>
    %16 = arith.mulf %14, %15 : vector<2x256xf32>
    %17 = arith.addf %9, %16 : vector<2x256xf32>
    %18 = vector.extract_strided_slice %10 {offsets = [0, 1], sizes = [2, 1], strides = [1, 1]} : vector<2x2xf32> to vector<2x1xf32>
    %19 = vector.extract_strided_slice %11 {offsets = [1, 0], sizes = [1, 256], strides = [1, 1]} : vector<2x256xf32> to vector<1x256xf32>
    %20 = vector.broadcast %18 : vector<2x1xf32> to vector<2x256xf32>
    %21 = vector.broadcast %19 : vector<1x256xf32> to vector<2x256xf32>
    %22 = arith.mulf %20, %21 : vector<2x256xf32>
    %23 = arith.addf %17, %22 : vector<2x256xf32>
    %c0_12 = arith.constant 0 : index
    %c0_13 = arith.constant 0 : index
    %24 = vector.load %arg6[%c0_12, %c0_13] : memref<256x256xf32, #tpu.memory_space<vmem>>, vector<256x256xf32>
    %cst_14 = arith.constant dense<0.000000e+00> : vector<2x256xf32>
    %25 = tpu.matmul %23, %24, %cst_14 {dimension_numbers = #tpu.dot_dimension_numbers<[1], [0], [0], [1], [0, 0, 1, 1], [], []>} : vector<2x256xf32>, vector<256x256xf32>, vector<2x256xf32> -> vector<2x256xf32>
    %c0_15 = arith.constant 0 : index
    %c0_16 = arith.constant 0 : index
    %26 = vector.load %arg7[%c0_15, %c0_16] : memref<1x256xf32, #tpu.memory_space<vmem>>, vector<1x256xf32>
    %27 = vector.broadcast %26 : vector<1x256xf32> to vector<2x256xf32>
    %28 = arith.addf %25, %27 : vector<2x256xf32>
    %c0_17 = arith.constant 0 : index
    %c0_18 = arith.constant 0 : index
    %29 = vector.load %arg8[%c0_17, %c0_18] : memref<2x256xf32, #tpu.memory_space<vmem>>, vector<2x256xf32>
    tpu.vector_store %arg8[%c0_17, %c0_18], %28 {strides = array<i32>} : memref<2x256xf32, #tpu.memory_space<vmem>>, vector<2x256xf32>,
    return
  }
  func.func @transform_0(%arg0: i32) -> (i32, i32, i32) {
    %c0_i32 = arith.constant 0 : i32
    %c0_i32_0 = arith.constant 0 : i32
    %c0_i32_1 = arith.constant 0 : i32
    return %arg0, %c0_i32, %c0_i32_0 : i32, i32, i32
  }
  func.func @transform_1(%arg0: i32) -> (i32, i32) {
    %c0_i32 = arith.constant 0 : i32
    %c0_i32_0 = arith.constant 0 : i32
    return %arg0, %c0_i32 : i32, i32
  }
  func.func @transform_2(%arg0: i32) -> (i32, i32) {
    %c0_i32 = arith.constant 0 : i32
    %c0_i32_0 = arith.constant 0 : i32
    %c0_i32_1 = arith.constant 0 : i32
    return %c0_i32, %c0_i32_0 : i32, i32
  }
  func.func @transform_3(%arg0: i32) -> (i32, i32) {
    %c0_i32 = arith.constant 0 : i32
    %c0_i32_0 = arith.constant 0 : i32
    %c0_i32_1 = arith.constant 0 : i32
    return %c0_i32, %c0_i32_0 : i32, i32
  }
  func.func @transform_4(%arg0: i32) -> (i32, i32) {
    %c0_i32 = arith.constant 0 : i32
    %c0_i32_0 = arith.constant 0 : i32
    %c0_i32_1 = arith.constant 0 : i32
    return %c0_i32, %c0_i32_0 : i32, i32
  }
  func.func @transform_5(%arg0: i32) -> (i32, i32) {
    %c0_i32 = arith.constant 0 : i32
    %c0_i32_0 = arith.constant 0 : i32
    %c0_i32_1 = arith.constant 0 : i32
    return %c0_i32, %c0_i32_0 : i32, i32
  }
  func.func @transform_6(%arg0: i32) -> (i32, i32) {
    %c0_i32 = arith.constant 0 : i32
    %c0_i32_0 = arith.constant 0 : i32
    %c0_i32_1 = arith.constant 0 : i32
    return %c0_i32, %c0_i32_0 : i32, i32
  }
  func.func @transform_7(%arg0: i32) -> (i32, i32) {
    %c0_i32 = arith.constant 0 : i32
    %c0_i32_0 = arith.constant 0 : i32
    return %arg0, %c0_i32 : i32, i32
  }
}

</mosaic_0001>

<llo_original>
// kernel: tpu_custom_call.1
$region0: #{tpu_custom_call.1}
  #allocation0 [shape = 'u32[]', space=smem, size = 0x4, offset = 0x4, fixed_abs, tag = 'smem constant byte address 0x4 - core index']
  #allocation1 [shape = 'u32[144,128]{1,0:T(1,128)}', space=vmem, size = 0x12000, scoped, tag = 'internal scratch']
  %s0 = inlined_call_operand.hbm [shape: bf16[2,64,135], index: 0, kind: input, shape index: {}]
  %s1 = inlined_call_operand.vmem [shape: f32[2,2], index: 1, kind: input, shape index: {}]
  %s2 = inlined_call_operand.hbm [shape: f32[64,256], index: 2, kind: input, shape index: {}]
  %s3 = inlined_call_operand.vmem [shape: f32[2,256], index: 3, kind: input, shape index: {}]
  %s4 = inlined_call_operand.vmem [shape: f32[1,256], index: 4, kind: input, shape index: {}]
  %s5 = inlined_call_operand.hbm [shape: f32[256,256], index: 5, kind: input, shape index: {}]
  %s6 = inlined_call_operand.vmem [shape: f32[1,256], index: 6, kind: input, shape index: {}]
  %s7 = inlined_call_operand.hbm [shape: f32[2,256], index: 7, kind: output, shape index: {}]
  %s8 = sld [smem:[#allocation0]]
  $region50: #{tpu_custom_call.1} parent=0
    _
  %s10 = ssub.s32 1, %s8
  %s11 = scalar_select 0, %s10, %s8
  $region1: #{tpu_custom_call.1} parent=0
    #allocation2 [shape = 'u8[65536]{0}', space=vmem, size = 0x10000, scoped, tag = 'input window, operand 0, single buffered']
    #allocation3 [shape = 's32[1]{0}', space=sflag, size = 0x4, scoped, tag = 'scoped memory for tpu_custom_call.1']
    #allocation4 [shape = 's32[1]{0}', space=sflag, size = 0x4, scoped, tag = 'scoped memory for tpu_custom_call.1']
    #allocation5 [shape = 'u8[65536]{0}', space=vmem, size = 0x10000, scoped, tag = 'input window, operand 2, single buffered']
    #allocation6 [shape = 's32[1]{0}', space=sflag, size = 0x4, scoped, tag = 'scoped memory for tpu_custom_call.1']
    #allocation7 [shape = 'u8[262144]{0}', space=vmem, size = 0x40000, scoped, tag = 'input window, operand 5, single buffered']
    #allocation8 [shape = 'u8[2048]{0}', space=vmem, size = 0x800, scoped, tag = 'output window, operand 0, single buffered']
    %12 = vsyncpa [#allocation3], 0
    %13 = vsyncpa [#allocation6], 0
    %14 = vsyncpa [#allocation4], 0
    // Predicated region
    $region2: #{tpu_custom_call.1} parent=1 // pred_check
      _
    $region3: #{tpu_custom_call.1} parent=1 // pred_check_branch
      %16 = sbr.rel (0) target = $region5
    $region4: #{tpu_custom_call.1} parent=1 // pred_region
      %s18 = ssub.s32 2048, 2048
      %19 = vsyncadd [#allocation3], %s18
      %s20 = sshll.u32 [#allocation2], 4
      %s21 = int_to_ptr.vmem [resolvable:$true] %s20
      %26 = dma.hbm_to_vmem [thread:$0]  %s0, 2048, %s21, [#allocation3], 128, 128, 8
    $region5: #{tpu_custom_call.1} parent=1 // pred_fallthru
      _
    // Predicated region
    $region6: #{tpu_custom_call.1} parent=1 // pred_check
      _
    $region7: #{tpu_custom_call.1} parent=1 // pred_check_branch
      %28 = sbr.rel (0) target = $region9
    $region8: #{tpu_custom_call.1} parent=1 // pred_region
      _
    $region9: #{tpu_custom_call.1} parent=1 // pred_fallthru
      _
    // Predicated region
    $region10: #{tpu_custom_call.1} parent=1 // pred_check
      _
    $region11: #{tpu_custom_call.1} parent=1 // pred_check_branch
      %30 = sbr.rel (0) target = $region13
    $region12: #{tpu_custom_call.1} parent=1 // pred_region
      %s32 = ssub.s32 2048, 2048
      %33 = vsyncadd [#allocation6], %s32
      %s34 = sshll.u32 [#allocation5], 4
      %s35 = int_to_ptr.vmem [resolvable:$true] %s34
      %40 = dma.hbm_to_vmem [thread:$0]  %s2, 2048, %s35, [#allocation6], 256, 256, 16
    $region13: #{tpu_custom_call.1} parent=1 // pred_fallthru
      _
    // Predicated region
    $region14: #{tpu_custom_call.1} parent=1 // pred_check
      _
    $region15: #{tpu_custom_call.1} parent=1 // pred_check_branch
      %42 = sbr.rel (0) target = $region17
    $region16: #{tpu_custom_call.1} parent=1 // pred_region
      _
    $region17: #{tpu_custom_call.1} parent=1 // pred_fallthru
      _
    // Predicated region
    $region18: #{tpu_custom_call.1} parent=1 // pred_check
      _
    $region19: #{tpu_custom_call.1} parent=1 // pred_check_branch
      %44 = sbr.rel (0) target = $region21
    $region20: #{tpu_custom_call.1} parent=1 // pred_region
      _
    $region21: #{tpu_custom_call.1} parent=1 // pred_fallthru
      _
    // Predicated region
    $region22: #{tpu_custom_call.1} parent=1 // pred_check
      _
    $region23: #{tpu_custom_call.1} parent=1 // pred_check_branch
      %46 = sbr.rel (0) target = $region25
    $region24: #{tpu_custom_call.1} parent=1 // pred_region
      %s48 = ssub.s32 8192, 8192
      %49 = vsyncadd [#allocation6], %s48
      %s50 = sshll.u32 [#allocation7], 4
      %s51 = int_to_ptr.vmem [resolvable:$true] %s50
      %56 = dma.hbm_to_vmem [thread:$0]  %s5, 8192, %s51, [#allocation6], 256, 256, 16
    $region25: #{tpu_custom_call.1} parent=1 // pred_fallthru
      _
    // Predicated region
    $region26: #{tpu_custom_call.1} parent=1 // pred_check
      _
    $region27: #{tpu_custom_call.1} parent=1 // pred_check_branch
      %58 = sbr.rel (0) target = $region29
    $region28: #{tpu_custom_call.1} parent=1 // pred_region
      _
    $region29: #{tpu_custom_call.1} parent=1 // pred_fallthru
      _
    // Predicated region
    $region30: #{tpu_custom_call.1} parent=1 // pred_check
      _
    $region31: #{tpu_custom_call.1} parent=1 // pred_check_branch
      %60 = sbr.rel (0) target = $region33
    $region32: #{tpu_custom_call.1} parent=1 // pred_region
      %61 = dma.done [#allocation3], 2048
    $region33: #{tpu_custom_call.1} parent=1 // pred_fallthru
      _
    // Predicated region
    $region34: #{tpu_custom_call.1} parent=1 // pred_check
      _
    $region35: #{tpu_custom_call.1} parent=1 // pred_check_branch
      %63 = sbr.rel (0) target = $region37
    $region36: #{tpu_custom_call.1} parent=1 // pred_region
      %64 = dma.done [#allocation6], 2048
    $region37: #{tpu_custom_call.1} parent=1 // pred_fallthru
      _
    // Predicated region
    $region38: #{tpu_custom_call.1} parent=1 // pred_check
      _
    $region39: #{tpu_custom_call.1} parent=1 // pred_check_branch
      %66 = sbr.rel (0) target = $region41
    $region40: #{tpu_custom_call.1} parent=1 // pred_region
      %67 = dma.done [#allocation6], 8192
    $region41: #{tpu_custom_call.1} parent=1 // pred_fallthru
      _
    %v68 = vld [vmem:[#allocation2] sm:$0xff]
    %v69 = vld [vmem:[#allocation2 + $0x8] sm:$0xff]
    %v70 = vld [vmem:[#allocation2 + $0x10] sm:$0xff]
    %v71 = vld [vmem:[#allocation2 + $0x18] sm:$0xff]
    %v72 = vld [vmem:[#allocation2 + $0x20] sm:$0xff]
    %v73 = vld [vmem:[#allocation2 + $0x28] sm:$0xff]
    %v74 = vld [vmem:[#allocation2 + $0x30] sm:$0xff]
    %v75 = vld [vmem:[#allocation2 + $0x38] sm:$0xff]
    %v76 = vld [vmem:[#allocation2 + $0x40] sm:$0xff]
    %v77 = vld [vmem:[#allocation2 + $0x48] sm:$0xff]
    %v78 = vld [vmem:[#allocation2 + $0x50] sm:$0xff]
    %v79 = vld [vmem:[#allocation2 + $0x58] sm:$0xff]
    %v80 = vld [vmem:[#allocation2 + $0x60] sm:$0xff]
    %v81 = vld [vmem:[#allocation2 + $0x68] sm:$0xff]
    %v82 = vld [vmem:[#allocation2 + $0x70] sm:$0xff]
    %v83 = vld [vmem:[#allocation2 + $0x78] sm:$0xff]
    %v84 = vunpack.c.l.bf16 %v68
    %v85 = vunpack.c.h.bf16 %v68
    %v86 = vunpack.c.l.bf16 %v69
    %v87 = vunpack.c.h.bf16 %v69
    %v88 = vunpack.c.l.bf16 %v70
    %v89 = vunpack.c.h.bf16 %v70
    %v90 = vunpack.c.l.bf16 %v71
    %v91 = vunpack.c.h.bf16 %v71
    %v92 = vunpack.c.l.bf16 %v72
    %v93 = vunpack.c.h.bf16 %v72
    %v94 = vunpack.c.l.bf16 %v73
    %v95 = vunpack.c.h.bf16 %v73
    %v96 = vunpack.c.l.bf16 %v74
    %v97 = vunpack.c.h.bf16 %v74
    %v98 = vunpack.c.l.bf16 %v75
    %v99 = vunpack.c.h.bf16 %v75
    %v100 = vunpack.c.l.bf16 %v76
    %v101 = vunpack.c.h.bf16 %v76
    %v102 = vunpack.c.l.bf16 %v77
    %v103 = vunpack.c.h.bf16 %v77
    %v104 = vunpack.c.l.bf16 %v78
    %v105 = vunpack.c.h.bf16 %v78
    %v106 = vunpack.c.l.bf16 %v79
    %v107 = vunpack.c.h.bf16 %v79
    %v108 = vunpack.c.l.bf16 %v80
    %v109 = vunpack.c.h.bf16 %v80
    %v110 = vunpack.c.l.bf16 %v81
    %v111 = vunpack.c.h.bf16 %v81
    %v112 = vunpack.c.l.bf16 %v82
    %v113 = vunpack.c.h.bf16 %v82
    %v114 = vunpack.c.l.bf16 %v83
    %v115 = vunpack.c.h.bf16 %v83
    %vm116 = vcmask 56320
    %v117 = vsel %vm116, %v85, 0.0
    %v118 = vadd.f32 %v84, %v117
    %119 = vadd.xlane.f32.xlu0 %v118
    %v120 = vpop.xlane.xlu0 %119
    %v121 = vsel %vm116, %v87, 0.0
    %v122 = vadd.f32 %v86, %v121
    %123 = vadd.xlane.f32.xlu0 %v122
    %v124 = vpop.xlane.xlu0 %123
    %v125 = vsel %vm116, %v89, 0.0
    %v126 = vadd.f32 %v88, %v125
    %127 = vadd.xlane.f32.xlu0 %v126
    %v128 = vpop.xlane.xlu0 %127
    %v129 = vsel %vm116, %v91, 0.0
    %v130 = vadd.f32 %v90, %v129
    %131 = vadd.xlane.f32.xlu0 %v130
    %v132 = vpop.xlane.xlu0 %131
    %v133 = vsel %vm116, %v93, 0.0
    %v134 = vadd.f32 %v92, %v133
    %135 = vadd.xlane.f32.xlu0 %v134
    %v136 = vpop.xlane.xlu0 %135
    %v137 = vsel %vm116, %v95, 0.0
    %v138 = vadd.f32 %v94, %v137
    %139 = vadd.xlane.f32.xlu0 %v138
    %v140 = vpop.xlane.xlu0 %139
    %v141 = vsel %vm116, %v97, 0.0
    %v142 = vadd.f32 %v96, %v141
    %143 = vadd.xlane.f32.xlu0 %v142
    %v144 = vpop.xlane.xlu0 %143
    %v145 = vsel %vm116, %v99, 0.0
    %v146 = vadd.f32 %v98, %v145
    %147 = vadd.xlane.f32.xlu0 %v146
    %v148 = vpop.xlane.xlu0 %147
    %v149 = vsel %vm116, %v101, 0.0
    %v150 = vadd.f32 %v100, %v149
    %151 = vadd.xlane.f32.xlu0 %v150
    %v152 = vpop.xlane.xlu0 %151
    %v153 = vsel %vm116, %v103, 0.0
    %v154 = vadd.f32 %v102, %v153
    %155 = vadd.xlane.f32.xlu0 %v154
    %v156 = vpop.xlane.xlu0 %155
    %v157 = vsel %vm116, %v105, 0.0
    %v158 = vadd.f32 %v104, %v157
    %159 = vadd.xlane.f32.xlu0 %v158
    %v160 = vpop.xlane.xlu0 %159
    %v161 = vsel %vm116, %v107, 0.0
    %v162 = vadd.f32 %v106, %v161
    %163 = vadd.xlane.f32.xlu0 %v162
    %v164 = vpop.xlane.xlu0 %163
    %v165 = vsel %vm116, %v109, 0.0
    %v166 = vadd.f32 %v108, %v165
    %167 = vadd.xlane.f32.xlu0 %v166
    %v168 = vpop.xlane.xlu0 %167
    %v169 = vsel %vm116, %v111, 0.0
    %v170 = vadd.f32 %v110, %v169
    %171 = vadd.xlane.f32.xlu0 %v170
    %v172 = vpop.xlane.xlu0 %171
    %v173 = vsel %vm116, %v113, 0.0
    %v174 = vadd.f32 %v112, %v173
    %175 = vadd.xlane.f32.xlu0 %v174
    %v176 = vpop.xlane.xlu0 %175
    %v177 = vsel %vm116, %v115, 0.0
    %v178 = vadd.f32 %v114, %v177
    %179 = vadd.xlane.f32.xlu0 %v178
    %v180 = vpop.xlane.xlu0 %179
    %v181 = vmul.f32 %v120, 0.0074074073
    %v182 = vmul.f32 %v124, 0.0074074073
    %v183 = vmul.f32 %v128, 0.0074074073
    %v184 = vmul.f32 %v132, 0.0074074073
    %v185 = vmul.f32 %v136, 0.0074074073
    %v186 = vmul.f32 %v140, 0.0074074073
    %v187 = vmul.f32 %v144, 0.0074074073
    %v188 = vmul.f32 %v148, 0.0074074073
    %v189 = vmul.f32 %v152, 0.0074074073
    %v190 = vmul.f32 %v156, 0.0074074073
    %v191 = vmul.f32 %v160, 0.0074074073
    %v192 = vmul.f32 %v164, 0.0074074073
    %v193 = vmul.f32 %v168, 0.0074074073
    %v194 = vmul.f32 %v172, 0.0074074073
    %v195 = vmul.f32 %v176, 0.0074074073
    %v196 = vmul.f32 %v180, 0.0074074073
    %v197 = vld [vmem:[#allocation5] sm:$0xff]
    %v198 = vld [vmem:[#allocation5 + $0x8] sm:$0xff]
    %v199 = vld [vmem:[#allocation5 + $0x10] sm:$0xff]
    %v200 = vld [vmem:[#allocation5 + $0x18] sm:$0xff]
    %v201 = vld [vmem:[#allocation5 + $0x20] sm:$0xff]
    %v202 = vld [vmem:[#allocation5 + $0x28] sm:$0xff]
    %v203 = vld [vmem:[#allocation5 + $0x30] sm:$0xff]
    %v204 = vld [vmem:[#allocation5 + $0x38] sm:$0xff]
    %v205 = vld [vmem:[#allocation5 + $0x40] sm:$0xff]
    %v206 = vld [vmem:[#allocation5 + $0x48] sm:$0xff]
    %v207 = vld [vmem:[#allocation5 + $0x50] sm:$0xff]
    %v208 = vld [vmem:[#allocation5 + $0x58] sm:$0xff]
    %v209 = vld [vmem:[#allocation5 + $0x60] sm:$0xff]
    %v210 = vld [vmem:[#allocation5 + $0x68] sm:$0xff]
    %v211 = vld [vmem:[#allocation5 + $0x70] sm:$0xff]
    %v212 = vld [vmem:[#allocation5 + $0x78] sm:$0xff]
    %v213 = vld [vmem:[%s4] sm:$0x3]
    %v215 = vlaneseq
    %v216 = vshrl.u32 %v215, 7
    %v217 = vsub.s32 0, %v216
    %v218 = vrot.slane %v213, %v217
    %v219 = vlaneseq
    %v220 = vshrl.u32 %v219, 7
    %v221 = vsub.s32 1, %v220
    %v222 = vrot.slane %v213, %v221
    %v241 = vlaneseq
    %v242 = vand.u32 %v241, 127
    %v243 = vlaneseq
    %v244 = vshrl.u32 %v243, 7
    %v245 = vsub.s32 %v242, %v244
    %v246 = vrot.slane %v181, %v245
    %v247 = vadd.s32 %v242, 4294967288
    %v248 = vlaneseq
    %v249 = vshrl.u32 %v248, 7
    %v250 = vsub.s32 %v247, %v249
    %v251 = vrot.slane %v182, %v250
    %vm252 = vcmask 130112
    %v253 = vsel %vm252, %v251, %v246
    %v254 = vadd.s32 %v242, 4294967280
    %v255 = vlaneseq
    %v256 = vshrl.u32 %v255, 7
    %v257 = vsub.s32 %v254, %v256
    %v258 = vrot.slane %v183, %v257
    %vm259 = vcmask 195712
    %v260 = vsel %vm259, %v258, %v253
    %v261 = vadd.s32 %v242, 4294967272
    %v262 = vlaneseq
    %v263 = vshrl.u32 %v262, 7
    %v264 = vsub.s32 %v261, %v263
    %v265 = vrot.slane %v184, %v264
    %vm266 = vcmask 261312
    %v267 = vsel %vm266, %v265, %v260
    %v268 = vadd.s32 %v242, 4294967264
    %v269 = vlaneseq
    %v270 = vshrl.u32 %v269, 7
    %v271 = vsub.s32 %v268, %v270
    %v272 = vrot.slane %v185, %v271
    %vm273 = vcmask 326912
    %v274 = vsel %vm273, %v272, %v267
    %v275 = vadd.s32 %v242, 4294967256
    %v276 = vlaneseq
    %v277 = vshrl.u32 %v276, 7
    %v278 = vsub.s32 %v275, %v277
    %v279 = vrot.slane %v186, %v278
    %vm280 = vcmask 392512
    %v281 = vsel %vm280, %v279, %v274
    %v282 = vadd.s32 %v242, 4294967248
    %v283 = vlaneseq
    %v284 = vshrl.u32 %v283, 7
    %v285 = vsub.s32 %v282, %v284
    %v286 = vrot.slane %v187, %v285
    %vm287 = vcmask 458112
    %v288 = vsel %vm287, %v286, %v281
    %v289 = vadd.s32 %v242, 4294967240
    %v290 = vlaneseq
    %v291 = vshrl.u32 %v290, 7
    %v292 = vsub.s32 %v289, %v291
    %v293 = vrot.slane %v188, %v292
    %vm294 = vcmask 523712
    %v295 = vsel %vm294, %v293, %v288
    %v296 = vlaneseq
    %v297 = vshrl.u32 %v296, 7
    %v298 = vsub.s32 %v242, %v297
    %v299 = vrot.slane %v189, %v298
    %v300 = vlaneseq
    %v301 = vshrl.u32 %v300, 7
    %v302 = vsub.s32 %v247, %v301
    %v303 = vrot.slane %v190, %v302
    %v304 = vsel %vm252, %v303, %v299
    %v305 = vlaneseq
    %v306 = vshrl.u32 %v305, 7
    %v307 = vsub.s32 %v254, %v306
    %v308 = vrot.slane %v191, %v307
    %v309 = vsel %vm259, %v308, %v304
    %v310 = vlaneseq
    %v311 = vshrl.u32 %v310, 7
    %v312 = vsub.s32 %v261, %v311
    %v313 = vrot.slane %v192, %v312
    %v314 = vsel %vm266, %v313, %v309
    %v315 = vlaneseq
    %v316 = vshrl.u32 %v315, 7
    %v317 = vsub.s32 %v268, %v316
    %v318 = vrot.slane %v193, %v317
    %v319 = vsel %vm273, %v318, %v314
    %v320 = vlaneseq
    %v321 = vshrl.u32 %v320, 7
    %v322 = vsub.s32 %v275, %v321
    %v323 = vrot.slane %v194, %v322
    %v324 = vsel %vm280, %v323, %v319
    %v325 = vlaneseq
    %v326 = vshrl.u32 %v325, 7
    %v327 = vsub.s32 %v282, %v326
    %v328 = vrot.slane %v195, %v327
    %v329 = vsel %vm287, %v328, %v324
    %v330 = vlaneseq
    %v331 = vshrl.u32 %v330, 7
    %v332 = vsub.s32 %v289, %v331
    %v333 = vrot.slane %v196, %v332
    %v334 = vsel %vm294, %v333, %v329
    %vm335 = vcmask 1041409
    %v336 = vsel %vm335, %v334, %v295
    %vm337 = vcmask 523264
    %v338 = vsel %vm337, %v336, 0
    %340 = vmatprep.subr.mxu0 %v198
    %341 = vmatpush1.msra.mxu0 %v197
    %342 = vmatprep.subr.mxu0 %v200
    %343 = vmatpush1.msra.mxu0 %v199
    %344 = vmatprep.subr.mxu0 %v202
    %345 = vmatpush1.msra.mxu0 %v201
    %346 = vmatprep.subr.mxu0 %v204
    %347 = vmatpush1.msra.mxu0 %v203
    %348 = vmatprep.subr.mxu0 %v206
    %349 = vmatpush1.msra.mxu0 %v205
    %350 = vmatprep.subr.mxu0 %v208
    %351 = vmatpush1.msra.mxu0 %v207
    %352 = vmatprep.subr.mxu0 %v210
    %353 = vmatpush1.msra.mxu0 %v209
    %354 = vmatprep.subr.mxu0 %v212
    %355 = vmatpush1.msra.mxu0 %v211
    %356 = vmatprep.subr.mxu0 0.0
    %357 = vmatpush1.msra.mxu0 0.0
    %358 = vmatprep.subr.mxu0 0.0
    %359 = vmatpush1.msra.mxu0 0.0
    %360 = vmatprep.subr.mxu0 0.0
    %361 = vmatpush1.msra.mxu0 0.0
    %362 = vmatprep.subr.mxu0 0.0
    %363 = vmatpush1.msra.mxu0 0.0
    %364 = vmatprep.subr.mxu0 0.0
    %365 = vmatpush1.msra.mxu0 0.0
    %366 = vmatprep.subr.mxu0 0.0
    %367 = vmatpush1.msra.mxu0 0.0
    %368 = vmatprep.subr.mxu0 0.0
    %369 = vmatpush1.msra.mxu0 0.0
    %370 = vmatprep.subr.mxu0 0.0
    %371 = vmatpush1.msra.mxu0 0.0
    %372 = vmatprep.subr.mxu0 0.0
    %373 = vmatpush1.msra.mxu0 0.0
    %374 = vmatprep.subr.mxu0 0.0
    %375 = vmatpush1.msra.mxu0 0.0
    %376 = vmatprep.subr.mxu0 0.0
    %377 = vmatpush1.msra.mxu0 0.0
    %378 = vmatprep.subr.mxu0 0.0
    %379 = vmatpush1.msra.mxu0 0.0
    %380 = vmatprep.subr.mxu0 0.0
    %381 = vmatpush1.msra.mxu0 0.0
    %382 = vmatprep.subr.mxu0 0.0
    %383 = vmatpush1.msra.mxu0 0.0
    %384 = vmatprep.subr.mxu0 0.0
    %385 = vmatpush1.msra.mxu0 0.0
    %386 = vmatprep.subr.mxu0 0.0
    %387 = vmatpush1.msra.mxu0 0.0
    %388 = vmatprep.subr.mxu0 0.0
    %389 = vmatpush1.msra.mxu0 0.0
    %390 = vmatprep.subr.mxu0 0.0
    %391 = vmatpush1.msra.mxu0 0.0
    %392 = vmatprep.subr.mxu0 0.0
    %393 = vmatpush1.msra.mxu0 0.0
    %394 = vmatprep.subr.mxu0 0.0
    %395 = vmatpush1.msra.mxu0 0.0
    %396 = vmatprep.subr.mxu0 0.0
    %397 = vmatpush1.msra.mxu0 0.0
    %398 = vmatprep.subr.mxu0 0.0
    %399 = vmatpush1.msra.mxu0 0.0
    %400 = vmatprep.subr.mxu0 0.0
    %401 = vmatpush1.msra.mxu0 0.0
    %402 = vmatprep.subr.mxu0 0.0
    %403 = vmatpush1.msra.mxu0 0.0
    %404 = vmatprep.mubr.f32.mxu0 0.0
    %405 = vmatmul.mubr.f32.gmra.mrb[0].mxu0 %v338
    %v406 = vpop.f32.mrb[0].mxu0
    %v407 = vadd.f32 %v218, %v406
    %v408 = vpop.f32.mrb[0].mxu0
    %v409 = vadd.f32 %v222, %v408
    %410 = vdwg.mxu0
    %v411 = vld [vmem:[%s1] sm:$0x3]
    %v412 = vld [vmem:[%s3] sm:$0xf]
    %414 = vset.pattern.permute.xlu0 0
    %415 = vperm.xlu0 %414, %v411
    %v416 = vpop.permute.xlu0 %415
    %v419 = vlaneseq
    %v420 = vshrl.u32 %v419, 7
    %v421 = vsub.s32 0, %v420
    %v422 = vrot.slane %v412, %v421
    %v423 = vlaneseq
    %v424 = vshrl.u32 %v423, 7
    %v425 = vsub.s32 2, %v424
    %v426 = vrot.slane %v412, %v425
    %v429 = vlaneseq
    %v430 = vshrl.u32 %v429, 7
    %v431 = vsub.s32 0, %v430
    %v432 = vrot.slane %v422, %v431
    %v433 = vlaneseq
    %v434 = vshrl.u32 %v433, 7
    %v435 = vsub.s32 0, %v434
    %v436 = vrot.slane %v426, %v435
    %v437 = vmul.f32 %v416, %v432
    %v438 = vmul.f32 %v416, %v436
    %v439 = vadd.f32 %v407, %v437
    %v440 = vadd.f32 %v409, %v438
    %441 = vset.pattern.permute.xlu0 1
    %442 = vperm.xlu0 %441, %v411
    %v443 = vpop.permute.xlu0 %442
    %v445 = vlaneseq
    %v446 = vshrl.u32 %v445, 7
    %v447 = vsub.s32 1, %v446
    %v448 = vrot.slane %v412, %v447
    %v449 = vlaneseq
    %v450 = vshrl.u32 %v449, 7
    %v451 = vsub.s32 3, %v450
    %v452 = vrot.slane %v412, %v451
    %v455 = vlaneseq
    %v456 = vshrl.u32 %v455, 7
    %v457 = vsub.s32 1, %v456
    %v458 = vrot.slane %v448, %v457
    %v459 = vlaneseq
    %v460 = vshrl.u32 %v459, 7
    %v461 = vsub.s32 1, %v460
    %v462 = vrot.slane %v452, %v461
    %v463 = vmul.f32 %v443, %v458
    %v464 = vmul.f32 %v443, %v462
    %v465 = vadd.f32 %v439, %v463
    %v466 = vadd.f32 %v440, %v464
    %v467 = vld [vmem:[#allocation7] sm:$0xff]
    %v468 = vld [vmem:[#allocation7 + $0x8] sm:$0xff]
    %v469 = vld [vmem:[#allocation7 + $0x10] sm:$0xff]
    %v470 = vld [vmem:[#allocation7 + $0x18] sm:$0xff]
    %v471 = vld [vmem:[#allocation7 + $0x20] sm:$0xff]
    %v472 = vld [vmem:[#allocation7 + $0x28] sm:$0xff]
    %v473 = vld [vmem:[#allocation7 + $0x30] sm:$0xff]
    %v474 = vld [vmem:[#allocation7 + $0x38] sm:$0xff]
    %v475 = vld [vmem:[#allocation7 + $0x40] sm:$0xff]
    %v476 = vld [vmem:[#allocation7 + $0x48] sm:$0xff]
    %v477 = vld [vmem:[#allocation7 + $0x50] sm:$0xff]
    %v478 = vld [vmem:[#allocation7 + $0x58] sm:$0xff]
    %v479 = vld [vmem:[#allocation7 + $0x60] sm:$0xff]
    %v480 = vld [vmem:[#allocation7 + $0x68] sm:$0xff]
    %v481 = vld [vmem:[#allocation7 + $0x70] sm:$0xff]
    %v482 = vld [vmem:[#allocation7 + $0x78] sm:$0xff]
    %v483 = vld [vmem:[#allocation7 + $0x80] sm:$0xff]
    %v484 = vld [vmem:[#allocation7 + $0x88] sm:$0xff]
    %v485 = vld [vmem:[#allocation7 + $0x90] sm:$0xff]
    %v486 = vld [vmem:[#allocation7 + $0x98] sm:$0xff]
    %v487 = vld [vmem:[#allocation7 + $0xa0] sm:$0xff]
    %v488 = vld [vmem:[#allocation7 + $0xa8] sm:$0xff]
    %v489 = vld [vmem:[#allocation7 + $0xb0] sm:$0xff]
    %v490 = vld [vmem:[#allocation7 + $0xb8] sm:$0xff]
    %v491 = vld [vmem:[#allocation7 + $0xc0] sm:$0xff]
    %v492 = vld [vmem:[#allocation7 + $0xc8] sm:$0xff]
    %v493 = vld [vmem:[#allocation7 + $0xd0] sm:$0xff]
    %v494 = vld [vmem:[#allocation7 + $0xd8] sm:$0xff]
    %v495 = vld [vmem:[#allocation7 + $0xe0] sm:$0xff]
    %v496 = vld [vmem:[#allocation7 + $0xe8] sm:$0xff]
    %v497 = vld [vmem:[#allocation7 + $0xf0] sm:$0xff]
    %v498 = vld [vmem:[#allocation7 + $0xf8] sm:$0xff]
    %v499 = vld [vmem:[#allocation7 + $0x100] sm:$0xff]
    %v500 = vld [vmem:[#allocation7 + $0x108] sm:$0xff]
    %v501 = vld [vmem:[#allocation7 + $0x110] sm:$0xff]
    %v502 = vld [vmem:[#allocation7 + $0x118] sm:$0xff]
    %v503 = vld [vmem:[#allocation7 + $0x120] sm:$0xff]
    %v504 = vld [vmem:[#allocation7 + $0x128] sm:$0xff]
    %v505 = vld [vmem:[#allocation7 + $0x130] sm:$0xff]
    %v506 = vld [vmem:[#allocation7 + $0x138] sm:$0xff]
    %v507 = vld [vmem:[#allocation7 + $0x140] sm:$0xff]
    %v508 = vld [vmem:[#allocation7 + $0x148] sm:$0xff]
    %v509 = vld [vmem:[#allocation7 + $0x150] sm:$0xff]
    %v510 = vld [vmem:[#allocation7 + $0x158] sm:$0xff]
    %v511 = vld [vmem:[#allocation7 + $0x160] sm:$0xff]
    %v512 = vld [vmem:[#allocation7 + $0x168] sm:$0xff]
    %v513 = vld [vmem:[#allocation7 + $0x170] sm:$0xff]
    %v514 = vld [vmem:[#allocation7 + $0x178] sm:$0xff]
    %v515 = vld [vmem:[#allocation7 + $0x180] sm:$0xff]
    %v516 = vld [vmem:[#allocation7 + $0x188] sm:$0xff]
    %v517 = vld [vmem:[#allocation7 + $0x190] sm:$0xff]
    %v518 = vld [vmem:[#allocation7 + $0x198] sm:$0xff]
    %v519 = vld [vmem:[#allocation7 + $0x1a0] sm:$0xff]
    %v520 = vld [vmem:[#allocation7 + $0x1a8] sm:$0xff]
    %v521 = vld [vmem:[#allocation7 + $0x1b0] sm:$0xff]
    %v522 = vld [vmem:[#allocation7 + $0x1b8] sm:$0xff]
    %v523 = vld [vmem:[#allocation7 + $0x1c0] sm:$0xff]
    %v524 = vld [vmem:[#allocation7 + $0x1c8] sm:$0xff]
    %v525 = vld [vmem:[#allocation7 + $0x1d0] sm:$0xff]
    %v526 = vld [vmem:[#allocation7 + $0x1d8] sm:$0xff]
    %v527 = vld [vmem:[#allocation7 + $0x1e0] sm:$0xff]
    %v528 = vld [vmem:[#allocation7 + $0x1e8] sm:$0xff]
    %v529 = vld [vmem:[#allocation7 + $0x1f0] sm:$0xff]
    %v530 = vld [vmem:[#allocation7 + $0x1f8] sm:$0xff]
    %v531 = vld [vmem:[%s6] sm:$0x3]
    %v533 = vlaneseq
    %v534 = vshrl.u32 %v533, 7
    %v535 = vsub.s32 0, %v534
    %v536 = vrot.slane %v531, %v535
    %v537 = vlaneseq
    %v538 = vshrl.u32 %v537, 7
    %v539 = vsub.s32 1, %v538
    %v540 = vrot.slane %v531, %v539
    %543 = vmatprep.subr.mxu0 %v468
    %544 = vmatpush1.msra.mxu0 %v467
    %545 = vmatprep.subr.mxu0 %v470
    %546 = vmatpush1.msra.mxu0 %v469
    %547 = vmatprep.subr.mxu0 %v472
    %548 = vmatpush1.msra.mxu0 %v471
    %549 = vmatprep.subr.mxu0 %v474
    %550 = vmatpush1.msra.mxu0 %v473
    %551 = vmatprep.subr.mxu0 %v476
    %552 = vmatpush1.msra.mxu0 %v475
    %553 = vmatprep.subr.mxu0 %v478
    %554 = vmatpush1.msra.mxu0 %v477
    %555 = vmatprep.subr.mxu0 %v480
    %556 = vmatpush1.msra.mxu0 %v479
    %557 = vmatprep.subr.mxu0 %v482
    %558 = vmatpush1.msra.mxu0 %v481
    %559 = vmatprep.subr.mxu0 %v484
    %560 = vmatpush1.msra.mxu0 %v483
    %561 = vmatprep.subr.mxu0 %v486
    %562 = vmatpush1.msra.mxu0 %v485
    %563 = vmatprep.subr.mxu0 %v488
    %564 = vmatpush1.msra.mxu0 %v487
    %565 = vmatprep.subr.mxu0 %v490
    %566 = vmatpush1.msra.mxu0 %v489
    %567 = vmatprep.subr.mxu0 %v492
    %568 = vmatpush1.msra.mxu0 %v491
    %569 = vmatprep.subr.mxu0 %v494
    %570 = vmatpush1.msra.mxu0 %v493
    %571 = vmatprep.subr.mxu0 %v496
    %572 = vmatpush1.msra.mxu0 %v495
    %573 = vmatprep.subr.mxu0 %v498
    %574 = vmatpush1.msra.mxu0 %v497
    %575 = vmatprep.subr.mxu0 %v500
    %576 = vmatpush1.msra.mxu0 %v499
    %577 = vmatprep.subr.mxu0 %v502
    %578 = vmatpush1.msra.mxu0 %v501
    %579 = vmatprep.subr.mxu0 %v504
    %580 = vmatpush1.msra.mxu0 %v503
    %581 = vmatprep.subr.mxu0 %v506
    %582 = vmatpush1.msra.mxu0 %v505
    %583 = vmatprep.subr.mxu0 %v508
    %584 = vmatpush1.msra.mxu0 %v507
    %585 = vmatprep.subr.mxu0 %v510
    %586 = vmatpush1.msra.mxu0 %v509
    %587 = vmatprep.subr.mxu0 %v512
    %588 = vmatpush1.msra.mxu0 %v511
    %589 = vmatprep.subr.mxu0 %v514
    %590 = vmatpush1.msra.mxu0 %v513
    %591 = vmatprep.subr.mxu0 %v516
    %592 = vmatpush1.msra.mxu0 %v515
    %593 = vmatprep.subr.mxu0 %v518
    %594 = vmatpush1.msra.mxu0 %v517
    %595 = vmatprep.subr.mxu0 %v520
    %596 = vmatpush1.msra.mxu0 %v519
    %597 = vmatprep.subr.mxu0 %v522
    %598 = vmatpush1.msra.mxu0 %v521
    %599 = vmatprep.subr.mxu0 %v524
    %600 = vmatpush1.msra.mxu0 %v523
    %601 = vmatprep.subr.mxu0 %v526
    %602 = vmatpush1.msra.mxu0 %v525
    %603 = vmatprep.subr.mxu0 %v528
    %604 = vmatpush1.msra.mxu0 %v527
    %605 = vmatprep.subr.mxu0 %v530
    %606 = vmatpush1.msra.mxu0 %v529
    %607 = vmatprep.mubr.f32.mxu0 %v466
    %608 = vmatmul.mubr.f32.gmra.mrb[0].mxu0 %v465
    %v609 = vpop.f32.mrb[0].mxu0
    %v610 = vadd.f32 %v536, %v609
    %v611 = vpop.f32.mrb[0].mxu0
    %v612 = vadd.f32 %v540, %v611
    %613 = vdwg.mxu0
    %v616 = vcombine.low %v610, %v612
    %v618 = vunpack.c.l.s4 1983009808
    %v619 = vunpack.c.0.s8 %v618
    %v620 = vlaneseq
    %v621 = vshrl.u32 %v620, 7
    %v622 = vsub.s32 %v619, %v621
    %v623 = vrot.slane %v616, %v622
    %625 = vst [vmem:[#allocation8] sm:$0xf] %v623
    // Predicated region
    $region42: #{tpu_custom_call.1} parent=1 // pred_check
      _
    $region43: #{tpu_custom_call.1} parent=1 // pred_check_branch
      %627 = sbr.rel (0) target = $region45
    $region44: #{tpu_custom_call.1} parent=1 // pred_region
      %s629 = ssub.s32 64, 64
      %630 = vsyncadd [#allocation4], %s629
      %s632 = sshll.u32 [#allocation8], 4
      %s633 = int_to_ptr.vmem [resolvable:$true] %s632
      %635 = dma.vmem_to_hbm [thread:$0]  %s633, 64, %s7, [#allocation4]
    $region45: #{tpu_custom_call.1} parent=1 // pred_fallthru
      _
    // Predicated region
    $region46: #{tpu_custom_call.1} parent=1 // pred_check
      _
    $region47: #{tpu_custom_call.1} parent=1 // pred_check_branch
      %637 = sbr.rel (0) target = $region49
    $region48: #{tpu_custom_call.1} parent=1 // pred_region
      %638 = dma.done [#allocation4], 64
    $region49: #{tpu_custom_call.1} parent=1 // pred_fallthru
      _
    %639 = vsyncpa [#allocation3], 1
    %640 = vsyncpa [#allocation6], 1
    %641 = vsyncpa [#allocation4], 1

</llo_original>
